<compile_context>
chip_gen: v7x
topology: tpu7x:2x2x1
jax: 0.10.0
libtpu: 0.0.40
codegen_flags: <defaults>
</compile_context>

<pallas_src>
import math

import jax
import jax.numpy as jnp
from jax import lax
from jax.experimental import pallas as pl
from jax.experimental.pallas import tpu as pltpu


# ---------------------------------------------------------------------------
# Generic tiled linear kernel: y[b, s-tile] = x[b, s-tile] @ W + bias
# Used for the fused QKV projection (W = [D, 3D]) and the output projection.
# ---------------------------------------------------------------------------
def _linear_kernel(x_ref, w_ref, b_ref, o_ref):
    # x_ref: (1, tS, Din), w_ref: (Din, Dout), b_ref: (1, Dout)
    y = jnp.dot(x_ref[0], w_ref[...], preferred_element_type=jnp.float32)
    o_ref[0] = (y + b_ref[...].astype(jnp.float32)).astype(o_ref.dtype)


def linear(x, w, b, *, ts=None):
    B, S, Din = x.shape
    Dout = w.shape[1]
    if ts is None:
        ts = S if S <= 512 else 512  # tile S at large shapes: pipeline stages + VMEM
    assert S % ts == 0
    return pl.pallas_call(
        _linear_kernel,
        out_shape=jax.ShapeDtypeStruct((B, S, Dout), x.dtype),
        grid_spec=pltpu.PrefetchScalarGridSpec(
            num_scalar_prefetch=0,
            grid=(B, S // ts),
            in_specs=[
                pl.BlockSpec((1, ts, Din), lambda b, s: (b, s, 0)),
                pl.BlockSpec((Din, Dout), lambda b, s: (0, 0)),
                pl.BlockSpec((1, Dout), lambda b, s: (0, 0)),
            ],
            out_specs=pl.BlockSpec((1, ts, Dout), lambda b, s: (b, s, 0)),
        ),
        compiler_params=pltpu.CompilerParams(
            dimension_semantics=("parallel", "parallel")
        ),
    )(x, w, b)


# ---------------------------------------------------------------------------
# Cross-attention QKV projection: one kernel, three matmuls, one [B,S,3D] out.
# ---------------------------------------------------------------------------
def _qkv_cross_kernel(xq_ref, xk_ref, xv_ref, wq_ref, wk_ref, wv_ref,
                      bq_ref, bk_ref, bv_ref, o_ref):
    f32 = jnp.float32
    yq = jnp.dot(xq_ref[0], wq_ref[...], preferred_element_type=f32) + bq_ref[...].astype(f32)
    yk = jnp.dot(xk_ref[0], wk_ref[...], preferred_element_type=f32) + bk_ref[...].astype(f32)
    yv = jnp.dot(xv_ref[0], wv_ref[...], preferred_element_type=f32) + bv_ref[...].astype(f32)
    o_ref[0] = jnp.concatenate([yq, yk, yv], axis=-1).astype(o_ref.dtype)


def qkv_project_cross(xq, xk, xv, params, *, ts=None):
    B, S, D = xq.shape
    if ts is None:
        ts = S if S <= 512 else 512
    assert S % ts == 0
    act_spec = pl.BlockSpec((1, ts, D), lambda b, s: (b, s, 0))
    w_spec = pl.BlockSpec((D, D), lambda b, s: (0, 0))
    b_spec = pl.BlockSpec((1, D), lambda b, s: (0, 0))
    return pl.pallas_call(
        _qkv_cross_kernel,
        out_shape=jax.ShapeDtypeStruct((B, S, 3 * D), xq.dtype),
        grid_spec=pltpu.PrefetchScalarGridSpec(
            num_scalar_prefetch=0,
            grid=(B, S // ts),
            in_specs=[act_spec, act_spec, act_spec,
                      w_spec, w_spec, w_spec,
                      b_spec, b_spec, b_spec],
            out_specs=pl.BlockSpec((1, ts, 3 * D), lambda b, s: (b, s, 0)),
        ),
        compiler_params=pltpu.CompilerParams(
            dimension_semantics=("parallel", "parallel")
        ),
    )(xq, xk, xv,
      params["wq_w"], params["wk_w"], params["wv_w"],
      params["wq_b"], params["wk_b"], params["wv_b"])


# ---------------------------------------------------------------------------
# Attention kernel: one grid step per batch, all H heads processed in-kernel.
#   qkv_ref:    (1, S, 3D)   -> per-head q/k/v via static slices of one load
#   mask_ref:   (1, 1, S, S) (1 = keep, 0 = masked -> -1e9), fetched once/batch
#   ctx_ref:    (1, S, D)    lane-dense merged context (no head transpose)
#   scores_ref: (1, H, S, S) post-softmax probabilities
# ---------------------------------------------------------------------------
def _attention_kernel(qkv_ref, mask_ref, ctx_ref, scores_ref):
    H = scores_ref.shape[1]
    D = ctx_ref.shape[2]
    d_k = D // H
    inv_sqrt_dk = jnp.float32(1.0 / math.sqrt(d_k))

    qkv = qkv_ref[0]                        # (S, 3D), loaded once for all heads
    masked = mask_ref[0, 0] == 0            # (S, S), reused for every head
    neg_inf = jnp.float32(-1.0e9)

    ctx_parts = []
    for hi in range(H):                     # static unroll: H head-matmuls back to back
        q = qkv[:, hi * d_k:(hi + 1) * d_k].astype(jnp.float32) * inv_sqrt_dk
        k = qkv[:, D + hi * d_k: D + (hi + 1) * d_k].astype(jnp.float32)
        v = qkv[:, 2 * D + hi * d_k: 2 * D + (hi + 1) * d_k]

        # contract last dims directly -- no k.T materialization through the XLU
        s = lax.dot_general(q, k, (((1,), (1,)), ((), ())),
                            preferred_element_type=jnp.float32)
        s = jnp.where(masked, neg_inf, s)

        # numerically stable softmax; denominator reciprocal on the EUP slot
        m = jnp.max(s, axis=-1, keepdims=True)
        e = jnp.exp(s - m)
        p = e * pl.reciprocal(jnp.sum(e, axis=-1, keepdims=True), approx=True)

        scores_ref[0, hi] = p.astype(scores_ref.dtype)
        ctx_parts.append(
            jnp.dot(p.astype(v.dtype), v, preferred_element_type=jnp.float32))

    ctx_ref[0] = jnp.concatenate(ctx_parts, axis=-1).astype(ctx_ref.dtype)


def attention(qkv, mask, h):
    B, S, D3 = qkv.shape
    D = D3 // 3
    return pl.pallas_call(
        _attention_kernel,
        out_shape=(
            jax.ShapeDtypeStruct((B, S, D), qkv.dtype),
            jax.ShapeDtypeStruct((B, h, S, S), jnp.float32),
        ),
        grid_spec=pltpu.PrefetchScalarGridSpec(
            num_scalar_prefetch=0,
            grid=(B,),
            in_specs=[
                pl.BlockSpec((1, S, D3), lambda b: (b, 0, 0)),
                pl.BlockSpec((1, 1, S, S), lambda b: (b, 0, 0, 0)),
            ],
            out_specs=[
                pl.BlockSpec((1, S, D), lambda b: (b, 0, 0)),
                pl.BlockSpec((1, h, S, S), lambda b: (b, 0, 0, 0)),
            ],
        ),
        compiler_params=pltpu.CompilerParams(dimension_semantics=("parallel",)),
    )(qkv, mask)


# ---------------------------------------------------------------------------
# Full MultiHeadAttentionBlock forward
# ---------------------------------------------------------------------------
def multi_head_attention_forward(q, k, v, mask, params, h):
    """q, k, v: [B, S, D]; mask: [B, 1, S, S]; returns ([B, S, D], [B, H, S, S])."""
    if q is k and k is v:
        # Self-attention fast path: one [D, 3D] matmul reads x from HBM once
        # and fills the MXU with a 3x wider N.  (Weight concat is param prep.)
        wqkv = jnp.concatenate(
            [params["wq_w"], params["wk_w"], params["wv_w"]], axis=1)
        bqkv = jnp.concatenate(
            [params["wq_b"], params["wk_b"], params["wv_b"]], axis=1)
        qkv = linear(q, wqkv, bqkv)
    else:
        qkv = qkv_project_cross(q, k, v, params)

    ctx, scores = attention(qkv, mask, h)      # ctx already [B, S, D], lane-dense
    out = linear(ctx, params["wo_w"], params["wo_b"])
    return out, scores


# ---------------------------------------------------------------------------
# Pure-JAX reference for verification
# ---------------------------------------------------------------------------
def reference_forward(q, k, v, mask, params, h):
    B, S, D = q.shape
    d_k = D // h

    def lin(x, w, b):
        return x @ w + b

    query = lin(q, params["wq_w"], params["wq_b"])
    key = lin(k, params["wk_w"], params["wk_b"])
    value = lin(v, params["wv_w"], params["wv_b"])

    def split_heads(x):
        return x.reshape(B, S, h, d_k).transpose(0, 2, 1, 3)

    query, key, value = split_heads(query), split_heads(key), split_heads(value)
    scores = jnp.einsum("bhqd,bhkd->bhqk", query, key) / math.sqrt(d_k)
    scores = jnp.where(mask == 0, -1.0e9, scores)
    scores = jax.nn.softmax(scores, axis=-1)
    ctx = jnp.einsum("bhqk,bhkd->bhqd", scores, value)
    ctx = ctx.transpose(0, 2, 1, 3).reshape(B, S, D)
    return lin(ctx, params["wo_w"], params["wo_b"]), scores


if __name__ == "__main__":
    B, S, D, H = 2, 8, 32, 4  # batch, seq, d_model, heads (d_k = 8)

    key0 = jax.random.PRNGKey(0)
    keys = jax.random.split(key0, 12)

    def init_linear(kw, kb, din, dout):
        bound = 1.0 / math.sqrt(din)
        w = jax.random.uniform(kw, (din, dout), jnp.float32, -bound, bound)
        b = jax.random.uniform(kb, (1, dout), jnp.float32, -bound, bound)
        return w, b

    wq_w, wq_b = init_linear(keys[0], keys[1], D, D)
    wk_w, wk_b = init_linear(keys[2], keys[3], D, D)
    wv_w, wv_b = init_linear(keys[4], keys[5], D, D)
    wo_w, wo_b = init_linear(keys[6], keys[7], D, D)
    params = dict(
        wq_w=wq_w, wq_b=wq_b, wk_w=wk_w, wk_b=wk_b,
        wv_w=wv_w, wv_b=wv_b, wo_w=wo_w, wo_b=wo_b,
    )

    x = jax.random.normal(keys[8], (B, S, D), jnp.float32)
    k_in = jax.random.normal(keys[9], (B, S, D), jnp.float32)
    v_in = jax.random.normal(keys[10], (B, S, D), jnp.float32)
    # causal mask, broadcast over heads: [B, 1, S, S]
    mask = jnp.broadcast_to(
        jnp.tril(jnp.ones((S, S), jnp.int32))[None, None, :, :], (B, 1, S, S)
    )

    # --- self-attention path (fused [D, 3D] QKV matmul) ---
    out_sa, sc_sa = multi_head_attention_forward(x, x, x, mask, params, H)
    out_sa = jax.block_until_ready(out_sa)
    sc_sa = jax.block_until_ready(sc_sa)
    ref_out_sa, ref_sc_sa = reference_forward(x, x, x, mask, params, H)
    assert out_sa.shape == (B, S, D)
    assert sc_sa.shape == (B, H, S, S)
    assert jnp.allclose(out_sa, ref_out_sa, atol=5e-3, rtol=5e-3)
    assert jnp.allclose(sc_sa, ref_sc_sa, atol=2e-3, rtol=2e-3)

    # --- cross-attention path (three projections in one kernel call) ---
    out_ca, sc_ca = multi_head_attention_forward(x, k_in, v_in, mask, params, H)
    out_ca = jax.block_until_ready(out_ca)
    sc_ca = jax.block_until_ready(sc_ca)
    ref_out_ca, ref_sc_ca = reference_forward(x, k_in, v_in, mask, params, H)
    assert out_ca.shape == (B, S, D)
    assert sc_ca.shape == (B, H, S, S)
    assert jnp.allclose(out_ca, ref_out_ca, atol=5e-3, rtol=5e-3)
    assert jnp.allclose(sc_ca, ref_sc_ca, atol=2e-3, rtol=2e-3)

    print("KERNEL_OK")
</pallas_src>

<mosaic_0001>
module attributes {stable_mosaic.version = 11 : i64} {
  func.func @_linear_kernel(%arg0: i32, %arg1: i32, %arg2: memref<1x8x32xf32, #tpu.memory_space<vmem>>, %arg3: memref<32x96xf32, #tpu.memory_space<vmem>>, %arg4: memref<1x96xf32, #tpu.memory_space<vmem>>, %arg5: memref<1x8x96xf32, #tpu.memory_space<vmem>>) attributes {dimension_semantics = [#tpu.dimension_semantics<parallel>, #tpu.dimension_semantics<parallel>], iteration_bounds = array<i64: 2, 1>, scalar_prefetch = 0 : i64, scratch_operands = 0 : i64, tpu.core_type = #tpu.core_type<tc>, window_params = [{transform_indices = @transform_0, window_bounds = array<i64: 1, 8, 32>}, {pipeline_mode = #tpu.pipeline_mode<synchronous>, transform_indices = @transform_1, window_bounds = array<i64: 32, 96>}, {pipeline_mode = #tpu.pipeline_mode<synchronous>, transform_indices = @transform_2, window_bounds = array<i64: 1, 96>}, {transform_indices = @transform_3, window_bounds = array<i64: 1, 8, 96>}]} {
    %c0 = arith.constant 0 : index
    %c0_0 = arith.constant 0 : index
    %c0_1 = arith.constant 0 : index
    %0 = vector.load %arg2[%c0, %c0_0, %c0_1] : memref<1x8x32xf32, #tpu.memory_space<vmem>>, vector<1x8x32xf32>
    %1 = vector.shape_cast %0 : vector<1x8x32xf32> to vector<8x32xf32>
    %c0_2 = arith.constant 0 : index
    %c0_3 = arith.constant 0 : index
    %2 = vector.load %arg3[%c0_2, %c0_3] : memref<32x96xf32, #tpu.memory_space<vmem>>, vector<32x96xf32>
    %cst = arith.constant dense<0.000000e+00> : vector<8x96xf32>
    %3 = tpu.matmul %1, %2, %cst {dimension_numbers = #tpu.dot_dimension_numbers<[1], [0], [0], [1], [0, 0, 1, 1], [], []>} : vector<8x32xf32>, vector<32x96xf32>, vector<8x96xf32> -> vector<8x96xf32>
    %c0_4 = arith.constant 0 : index
    %c0_5 = arith.constant 0 : index
    %4 = vector.load %arg4[%c0_4, %c0_5] : memref<1x96xf32, #tpu.memory_space<vmem>>, vector<1x96xf32>
    %5 = vector.broadcast %4 : vector<1x96xf32> to vector<8x96xf32>
    %6 = arith.addf %3, %5 : vector<8x96xf32>
    %c0_6 = arith.constant 0 : index
    %c0_7 = arith.constant 0 : index
    %c0_8 = arith.constant 0 : index
    %7 = vector.load %arg5[%c0_6, %c0_7, %c0_8] : memref<1x8x96xf32, #tpu.memory_space<vmem>>, vector<1x8x96xf32>
    %8 = vector.shape_cast %7 : vector<1x8x96xf32> to vector<8x96xf32>
    %9 = vector.shape_cast %6 : vector<8x96xf32> to vector<1x8x96xf32>
    tpu.vector_store %arg5[%c0_6, %c0_7, %c0_8], %9 {strides = array<i32>} : memref<1x8x96xf32, #tpu.memory_space<vmem>>, vector<1x8x96xf32>,
    return
  }
  func.func @transform_0(%arg0: i32, %arg1: i32) -> (i32, i32, i32) {
    %c0_i32 = arith.constant 0 : i32
    %c0_i32_0 = arith.constant 0 : i32
    return %arg0, %arg1, %c0_i32 : i32, i32, i32
  }
  func.func @transform_1(%arg0: i32, %arg1: i32) -> (i32, i32) {
    %c0_i32 = arith.constant 0 : i32
    %c0_i32_0 = arith.constant 0 : i32
    %c0_i32_1 = arith.constant 0 : i32
    return %c0_i32, %c0_i32_0 : i32, i32
  }
  func.func @transform_2(%arg0: i32, %arg1: i32) -> (i32, i32) {
    %c0_i32 = arith.constant 0 : i32
    %c0_i32_0 = arith.constant 0 : i32
    %c0_i32_1 = arith.constant 0 : i32
    return %c0_i32, %c0_i32_0 : i32, i32
  }
  func.func @transform_3(%arg0: i32, %arg1: i32) -> (i32, i32, i32) {
    %c0_i32 = arith.constant 0 : i32
    %c0_i32_0 = arith.constant 0 : i32
    return %arg0, %arg1, %c0_i32 : i32, i32, i32
  }
}

</mosaic_0001>

<llo_original>
// kernel: tpu_custom_call.1
$region0: #{tpu_custom_call.1}
  #allocation0 [shape = 'u32[]', space=smem, size = 0x4, offset = 0x4, fixed_abs, tag = 'smem constant byte address 0x4 - core index']
  #allocation1 [shape = 'u32[144,128]{1,0:T(1,128)}', space=vmem, size = 0x12000, scoped, tag = 'internal scratch']
  %s0 = inlined_call_operand.hbm [shape: f32[2,8,32], index: 0, kind: input, shape index: {}]
  %s1 = inlined_call_operand.hbm [shape: f32[32,96], index: 1, kind: input, shape index: {}]
  %s2 = inlined_call_operand.vmem [shape: f32[1,96], index: 2, kind: input, shape index: {}]
  %s3 = inlined_call_operand.hbm [shape: f32[2,8,96], index: 3, kind: output, shape index: {}]
  %s4 = sld [smem:[#allocation0]]
  $region53: #{tpu_custom_call.1} parent=0
    _
  %s6 = ssub.s32 1, %s4
  %s7 = scalar_select 0, %s6, %s4
  $region1: #{tpu_custom_call.1} parent=0
    #allocation2 [shape = 'u8[8192]{0}', space=vmem, size = 0x2000, scoped, tag = 'input window, operand 0']
    #allocation3 [shape = 's32[2]{0}', space=sflag, size = 0x8, scoped, tag = 'scoped memory for tpu_custom_call.1']
    #allocation4 [shape = 's32[2]{0}', space=sflag, size = 0x8, scoped, tag = 'scoped memory for tpu_custom_call.1']
    #allocation5 [shape = 'u8[16384]{0}', space=vmem, size = 0x4000, scoped, tag = 'input window, operand 1, single buffered']
    #allocation6 [shape = 's32[1]{0}', space=sflag, size = 0x4, scoped, tag = 'scoped memory for tpu_custom_call.1']
    #allocation7 [shape = 'u8[8192]{0}', space=vmem, size = 0x2000, scoped, tag = 'output window, operand 0']
    %8 = vsyncpa [#allocation3], 0
    %s9 = scalar_lea.sflag [#allocation3], 1
    %10 = vsyncpa %s9, 0
    %11 = vsyncpa [#allocation6], 0
    %12 = vsyncpa [#allocation4], 0
    %s13 = scalar_lea.sflag [#allocation4], 1
    %14 = vsyncpa %s13, 0
    loop: start=0, step=1, limit=4
    $region2: #{tpu_custom_call.1} parent=1 // loop_pre_header
      _
    $region3: #{tpu_custom_call.1} parent=1 // loop_header
      %s16 = sphi 0, %s20
      %p17 = scmp.ge.s32.totalorder %s16, 4
      %s23 = sphi 0, %s35
      %s24 = sphi 0, %s31
      %s25 = sphi 0, %s23
      %s26 = sphi 0, %s24
      %s27 = sphi 0, %s25
      %s28 = sphi 0, %s26
      %s40 = sphi 0, %s42
      %s43 = sphi 0, %s40
      %s44 = sphi 0, %s43
      %s60 = sphi 0, %s44
      %s64 = sphi 0, %s64
      %s66 = sphi 0, %s64
      %s67 = sphi 0, %s66
      %s81 = sphi 0, %s67
      %s85 = sphi 0, %s85
      %s87 = sphi 0, %s85
      %s88 = sphi 0, %s87
      %s102 = sphi 0, %s88
      %s110 = sphi 0, %s112
      %s113 = sphi 0, %s110
      %s114 = sphi 0, %s113
      %s130 = sphi 0, %s114
    $region4: #{tpu_custom_call.1} parent=1 // loop_header_branch
      %19 = sbr.rel (%p17) target = $region8
    $region5: #{tpu_custom_call.1} parent=1 // loop_body
      %s21 = ssub.s32 %s16, 1
      %s22 = ssub.s32 %s16, 2
      %s29 = sadd.s32 1, %s24
      %p30 = scmp.ge.s32.totalorder %s29, 1
      %s31 = scalar_select %p30, 0, %s29
      %s32 = sadd.s32 1, %s23
      %s33 = scalar_select %p30, %s32, %s23
      %p34 = scmp.ge.s32.totalorder %s33, 2
      %s35 = scalar_select %p34, 0, %s33
      %s36 = ssub.s32 %s23, %s35
      %s37 = ssub.s32 %s24, %s31
      %s38 = sor.u32 %s36, %s37
      %p39 = scmp.eq.s32.totalorder %s38, 0
      %s41 = sadd.s32 %s40, 1
      %s42 = scalar_select %p39, %s40, %s41
      %p45 = pneg %p39
      %p46 = scmp.eq.s32.totalorder %s16, 1
      %p47 = por %p45, %p46
      %p48 = scmp.ne.s32.totalorder %s40, %s43
      %p49 = scmp.eq.s32.totalorder %s16, 0
      %p50 = por %p48, %p49
      %p51 = scmp.ne.s32.totalorder %s40, %s43
      %p52 = scmp.eq.s32.totalorder %s21, 1
      %p53 = por %p51, %p52
      %p54 = scmp.ne.s32.totalorder %s43, %s44
      %p55 = scmp.eq.s32.totalorder %s21, 0
      %p56 = por %p54, %p55
      %p57 = scmp.ne.s32.totalorder %s43, %s44
      %p58 = scmp.eq.s32.totalorder %s22, 1
      %p59 = por %p57, %p58
      %p61 = scmp.ne.s32.totalorder %s44, %s60
      %p62 = scmp.eq.s32.totalorder %s22, 0
      %p63 = por %p61, %p62
      %s65 = sadd.s32 %s64, 1
      %p68 = scmp.eq.s32.totalorder %s16, 1
      %p69 = scmp.ne.s32.totalorder %s64, %s66
      %p70 = scmp.eq.s32.totalorder %s16, 0
      %p71 = por %p69, %p70
      %p72 = scmp.ne.s32.totalorder %s64, %s66
      %p73 = scmp.eq.s32.totalorder %s21, 1
      %p74 = por %p72, %p73
      %p75 = scmp.ne.s32.totalorder %s66, %s67
      %p76 = scmp.eq.s32.totalorder %s21, 0
      %p77 = por %p75, %p76
      %p78 = scmp.ne.s32.totalorder %s66, %s67
      %p79 = scmp.eq.s32.totalorder %s22, 1
      %p80 = por %p78, %p79
      %p82 = scmp.ne.s32.totalorder %s67, %s81
      %p83 = scmp.eq.s32.totalorder %s22, 0
      %p84 = por %p82, %p83
      %s86 = sadd.s32 %s85, 1
      %p89 = scmp.eq.s32.totalorder %s16, 1
      %p90 = scmp.ne.s32.totalorder %s85, %s87
      %p91 = scmp.eq.s32.totalorder %s16, 0
      %p92 = por %p90, %p91
      %p93 = scmp.ne.s32.totalorder %s85, %s87
      %p94 = scmp.eq.s32.totalorder %s21, 1
      %p95 = por %p93, %p94
      %p96 = scmp.ne.s32.totalorder %s87, %s88
      %p97 = scmp.eq.s32.totalorder %s21, 0
      %p98 = por %p96, %p97
      %p99 = scmp.ne.s32.totalorder %s87, %s88
      %p100 = scmp.eq.s32.totalorder %s22, 1
      %p101 = por %p99, %p100
      %p103 = scmp.ne.s32.totalorder %s88, %s102
      %p104 = scmp.eq.s32.totalorder %s22, 0
      %p105 = por %p103, %p104
      %s106 = ssub.s32 %s23, %s35
      %s107 = ssub.s32 %s24, %s31
      %s108 = sor.u32 %s106, %s107
      %p109 = scmp.eq.s32.totalorder %s108, 0
      %s111 = sadd.s32 %s110, 1
      %s112 = scalar_select %p109, %s110, %s111
      %p115 = pneg %p109
      %p116 = scmp.eq.s32.totalorder %s16, 1
      %p117 = por %p115, %p116
      %p118 = scmp.ne.s32.totalorder %s110, %s113
      %p119 = scmp.eq.s32.totalorder %s16, 0
      %p120 = por %p118, %p119
      %p121 = scmp.ne.s32.totalorder %s110, %s113
      %p122 = scmp.eq.s32.totalorder %s21, 1
      %p123 = por %p121, %p122
      %p124 = scmp.ne.s32.totalorder %s113, %s114
      %p125 = scmp.eq.s32.totalorder %s21, 0
      %p126 = por %p124, %p125
      %p127 = scmp.ne.s32.totalorder %s113, %s114
      %p128 = scmp.eq.s32.totalorder %s22, 1
      %p129 = por %p127, %p128
      %p131 = scmp.ne.s32.totalorder %s114, %s130
      %p132 = scmp.eq.s32.totalorder %s22, 0
      %p133 = por %p131, %p132
      %p134 = scmp.le.s32.totalorder 1, %s16
      %p135 = scmp.lt.s32.totalorder %s16, 3
      %p136 = pnand %p134, %p135
      %p137 = pneg %p136
      // Predicated region
      $region9: #{tpu_custom_call.1} parent=5 // pred_check
        _
      $region10: #{tpu_custom_call.1} parent=5 // pred_check_branch
        %139 = sbr.rel (%p136) target = $region12
      $region11: #{tpu_custom_call.1} parent=5 // pred_region
        %s140 = ssub.s32 %s16, 1
        // Predicated region
        $region13: #{tpu_custom_call.1} parent=11 // pred_check
          %p141 = pneg %p77
        $region14: #{tpu_custom_call.1} parent=11 // pred_check_branch
          %143 = sbr.rel (%p141) target = $region16
        $region15: #{tpu_custom_call.1} parent=11 // pred_region
          %s145 = ssub.s32 512, 512
          %146 = vsyncadd [#allocation6], %s145
          %s147 = sshll.u32 [#allocation5], 4
          %s148 = int_to_ptr.vmem [resolvable:$true] %s147
          %153 = dma.hbm_to_vmem [thread:$0]  %s1, 512, %s148, [#allocation6], 128, 128, 8
        $region16: #{tpu_custom_call.1} parent=11 // pred_fallthru
          _
        // Predicated region
        $region17: #{tpu_custom_call.1} parent=11 // pred_check
          %p154 = pneg %p98
        $region18: #{tpu_custom_call.1} parent=11 // pred_check_branch
          %156 = sbr.rel (%p154) target = $region20
        $region19: #{tpu_custom_call.1} parent=11 // pred_region
          _
        $region20: #{tpu_custom_call.1} parent=11 // pred_fallthru
          _
      $region12: #{tpu_custom_call.1} parent=5 // pred_fallthru
        _
      %p157 = scmp.lt.s32.totalorder %s16, 2
      // Predicated region
      $region21: #{tpu_custom_call.1} parent=5 // pred_check
        %p158 = pneg %p157
      $region22: #{tpu_custom_call.1} parent=5 // pred_check_branch
        %160 = sbr.rel (%p158) target = $region24
      $region23: #{tpu_custom_call.1} parent=5 // pred_region
        // Predicated region
        $region25: #{tpu_custom_call.1} parent=23 // pred_check
          %p161 = pneg %p50
        $region26: #{tpu_custom_call.1} parent=23 // pred_check_branch
          %163 = sbr.rel (%p161) target = $region28
        $region27: #{tpu_custom_call.1} parent=23 // pred_region
          %s164 = sand.u32 %s40, 1
          %s165 = scalar_lea.sflag [#allocation3], %s164
          %s166 = sand.u32 %s40, 1
          %s167 = smul.addr %s166, 8
          %s168 = scalar_lea.vmem [#allocation2], %s167
          %s170 = ssub.s32 128, 128
          %171 = vsyncadd %s165, %s170
          %s172 = sadd.s32 %s24, %s23
          %s173 = smul.addr %s172, 128
          %s174 = scalar_lea.hbm %s0, %s173
          %s176 = sshll.u32 %s168, 4
          %s177 = int_to_ptr.vmem [resolvable:$true] %s176
          %179 = dma.hbm_to_vmem [thread:$0]  %s174, 128, %s177, %s165
        $region28: #{tpu_custom_call.1} parent=23 // pred_fallthru
          _
      $region24: #{tpu_custom_call.1} parent=5 // pred_fallthru
        _
      %p180 = scmp.le.s32.totalorder 1, %s16
      %p181 = scmp.lt.s32.totalorder %s16, 3
      %p182 = pnand %p180, %p181
      %p183 = pneg %p182
      // Predicated region
      $region29: #{tpu_custom_call.1} parent=5 // pred_check
        _
      $region30: #{tpu_custom_call.1} parent=5 // pred_check_branch
        %185 = sbr.rel (%p182) target = $region32
      $region31: #{tpu_custom_call.1} parent=5 // pred_region
        %s186 = ssub.s32 %s16, 1
        %s187 = sand.u32 %s43, 1
        %s188 = scalar_lea.sflag [#allocation3], %s187
        %s189 = sand.u32 %s43, 1
        %s190 = smul.addr %s189, 8
        %s191 = scalar_lea.vmem [#allocation2], %s190
        // Predicated region
        $region33: #{tpu_custom_call.1} parent=31 // pred_check
          %p192 = pneg %p56
        $region34: #{tpu_custom_call.1} parent=31 // pred_check_branch
          %194 = sbr.rel (%p192) target = $region36
        $region35: #{tpu_custom_call.1} parent=31 // pred_region
          %195 = dma.done %s188, 128
        $region36: #{tpu_custom_call.1} parent=31 // pred_fallthru
          _
        // Predicated region
        $region37: #{tpu_custom_call.1} parent=31 // pred_check
          %p196 = pneg %p77
        $region38: #{tpu_custom_call.1} parent=31 // pred_check_branch
          %198 = sbr.rel (%p196) target = $region40
        $region39: #{tpu_custom_call.1} parent=31 // pred_region
          %199 = dma.done [#allocation6], 512
        $region40: #{tpu_custom_call.1} parent=31 // pred_fallthru
          _
        %s200 = sand.u32 %s43, 1
        %s201 = scalar_lea.sflag [#allocation3], %s200
        %s202 = sand.u32 %s43, 1
        %s203 = smul.addr %s202, 8
        %s204 = scalar_lea.vmem [#allocation2], %s203
        %p205 = pneg %p56
        %p206 = pneg %p53
        %p207 = pneg %p77
        %p208 = pneg %p74
        %p209 = pneg %p98
        %p210 = pneg %p95
        %p211 = pneg %p126
        %p212 = pneg %p123
        %s213 = sand.u32 %s113, 1
        %s214 = scalar_lea.sflag [#allocation4], %s213
        %s215 = sand.u32 %s113, 1
        %s216 = smul.addr %s215, 8
        %s217 = scalar_lea.vmem [#allocation7], %s216
        %v218 = vld [vmem:[%s191] sm:$0xff]
        %v219 = vld [vmem:[#allocation5] sm:$0xff]
        %v220 = vld [vmem:[#allocation5 + $0x8] sm:$0xff]
        %v221 = vld [vmem:[#allocation5 + $0x10] sm:$0xff]
        %v222 = vld [vmem:[#allocation5 + $0x18] sm:$0xff]
        %v223 = vld [vmem:[%s2] sm:$0x1]
        %v225 = vlaneseq
        %v226 = vshrl.u32 %v225, 7
        %v227 = vsub.s32 0, %v226
        %v228 = vrot.slane %v223, %v227
        %vm230 = vcmask 261120
        %v232 = vsel %vm230, %v218, 0
        %234 = vmatprep.subr.mxu0 0.0
        %235 = vmatpush1.msra.mxu0 %v219
        %236 = vmatprep.subr.mxu0 0.0
        %237 = vmatpush1.msra.mxu0 %v220
        %238 = vmatprep.subr.mxu0 0.0
        %239 = vmatpush1.msra.mxu0 %v221
        %240 = vmatprep.subr.mxu0 0.0
        %241 = vmatpush1.msra.mxu0 %v222
        %242 = vmatprep.subr.mxu0 0.0
        %243 = vmatpush1.msra.mxu0 0.0
        %244 = vmatprep.subr.mxu0 0.0
        %245 = vmatpush1.msra.mxu0 0.0
        %246 = vmatprep.subr.mxu0 0.0
        %247 = vmatpush1.msra.mxu0 0.0
        %248 = vmatprep.subr.mxu0 0.0
        %249 = vmatpush1.msra.mxu0 0.0
        %250 = vmatprep.subr.mxu0 0.0
        %251 = vmatpush1.msra.mxu0 0.0
        %252 = vmatprep.subr.mxu0 0.0
        %253 = vmatpush1.msra.mxu0 0.0
        %254 = vmatprep.subr.mxu0 0.0
        %255 = vmatpush1.msra.mxu0 0.0
        %256 = vmatprep.subr.mxu0 0.0
        %257 = vmatpush1.msra.mxu0 0.0
        %258 = vmatprep.subr.mxu0 0.0
        %259 = vmatpush1.msra.mxu0 0.0
        %260 = vmatprep.subr.mxu0 0.0
        %261 = vmatpush1.msra.mxu0 0.0
        %262 = vmatprep.subr.mxu0 0.0
        %263 = vmatpush1.msra.mxu0 0.0
        %264 = vmatprep.subr.mxu0 0.0
        %265 = vmatpush1.msra.mxu0 0.0
        %266 = vmatprep.subr.mxu0 0.0
        %267 = vmatpush1.msra.mxu0 0.0
        %268 = vmatprep.subr.mxu0 0.0
        %269 = vmatpush1.msra.mxu0 0.0
        %270 = vmatprep.subr.mxu0 0.0
        %271 = vmatpush1.msra.mxu0 0.0
        %272 = vmatprep.subr.mxu0 0.0
        %273 = vmatpush1.msra.mxu0 0.0
        %274 = vmatprep.subr.mxu0 0.0
        %275 = vmatpush1.msra.mxu0 0.0
        %276 = vmatprep.subr.mxu0 0.0
        %277 = vmatpush1.msra.mxu0 0.0
        %278 = vmatprep.subr.mxu0 0.0
        %279 = vmatpush1.msra.mxu0 0.0
        %280 = vmatprep.subr.mxu0 0.0
        %281 = vmatpush1.msra.mxu0 0.0
        %282 = vmatprep.subr.mxu0 0.0
        %283 = vmatpush1.msra.mxu0 0.0
        %284 = vmatprep.subr.mxu0 0.0
        %285 = vmatpush1.msra.mxu0 0.0
        %286 = vmatprep.subr.mxu0 0.0
        %287 = vmatpush1.msra.mxu0 0.0
        %288 = vmatprep.subr.mxu0 0.0
        %289 = vmatpush1.msra.mxu0 0.0
        %290 = vmatprep.subr.mxu0 0.0
        %291 = vmatpush1.msra.mxu0 0.0
        %292 = vmatprep.subr.mxu0 0.0
        %293 = vmatpush1.msra.mxu0 0.0
        %294 = vmatprep.subr.mxu0 0.0
        %295 = vmatpush1.msra.mxu0 0.0
        %296 = vmatprep.subr.mxu0 0.0
        %297 = vmatpush1.msra.mxu0 0.0
        %298 = vmatprep.mubr.f32.mxu0 0.0
        %299 = vmatmul.mubr.f32.gmra.mrb[0].mxu0 %v232
        %v300 = vpop.f32.mrb[0].mxu0
        %v301 = vadd.f32 %v228, %v300
        %v302 = vpop.f32.mrb[0].mxu0
        %303 = vdwg.mxu0
        %vm304 = vcmask 785408
        %305 = vst.msk [vmem:[%s217] sm:$0xff] %vm304, %v301
        %s306 = sand.u32 %s113, 1
        %s307 = scalar_lea.sflag [#allocation4], %s306
        %s308 = sand.u32 %s113, 1
        %s309 = smul.addr %s308, 8
        %s310 = scalar_lea.vmem [#allocation7], %s309
        // Predicated region
        $region41: #{tpu_custom_call.1} parent=31 // pred_check
          %p311 = pneg %p123
        $region42: #{tpu_custom_call.1} parent=31 // pred_check_branch
          %313 = sbr.rel (%p311) target = $region44
        $region43: #{tpu_custom_call.1} parent=31 // pred_region
          %s315 = ssub.s32 128, 128
          %316 = vsyncadd %s307, %s315
          %s317 = sadd.s32 %s26, %s25
          %s318 = smul.addr %s317, 128
          %s319 = scalar_lea.hbm %s3, %s318
          %s321 = sshll.u32 %s310, 4
          %s322 = int_to_ptr.vmem [resolvable:$true] %s321
          %324 = dma.vmem_to_hbm [thread:$0]  %s322, 128, %s319, %s307
        $region44: #{tpu_custom_call.1} parent=31 // pred_fallthru
          _
      $region32: #{tpu_custom_call.1} parent=5 // pred_fallthru
        _
      %p325 = scmp.le.s32.totalorder 2, %s16
      // Predicated region
      $region45: #{tpu_custom_call.1} parent=5 // pred_check
        %p326 = pneg %p325
      $region46: #{tpu_custom_call.1} parent=5 // pred_check_branch
        %328 = sbr.rel (%p326) target = $region48
      $region47: #{tpu_custom_call.1} parent=5 // pred_region
        %s329 = ssub.s32 %s16, 2
        // Predicated region
        $region49: #{tpu_custom_call.1} parent=47 // pred_check
          %p330 = pneg %p129
        $region50: #{tpu_custom_call.1} parent=47 // pred_check_branch
          %332 = sbr.rel (%p330) target = $region52
        $region51: #{tpu_custom_call.1} parent=47 // pred_region
          %s333 = sand.u32 %s114, 1
          %s334 = scalar_lea.sflag [#allocation4], %s333
          %s335 = sand.u32 %s114, 1
          %s336 = smul.addr %s335, 8
          %s337 = scalar_lea.vmem [#allocation7], %s336
          %338 = dma.done %s334, 128
        $region52: #{tpu_custom_call.1} parent=47 // pred_fallthru
          _
      $region48: #{tpu_custom_call.1} parent=5 // pred_fallthru
        _
    $region6: #{tpu_custom_call.1} parent=1 // loop_footer
      %s20 = sadd.s32 1, %s16
    $region7: #{tpu_custom_call.1} parent=1 // loop_footer_branch
      %15 = sbr.rel target = $region3
    $region8: #{tpu_custom_call.1} parent=1 // loop_exit
      _
    %339 = vsyncpa [#allocation3], 1
    %s340 = scalar_lea.sflag [#allocation3], 1
    %341 = vsyncpa %s340, 1
    %342 = vsyncpa [#allocation6], 1
    %343 = vsyncpa [#allocation4], 1
    %s344 = scalar_lea.sflag [#allocation4], 1
    %345 = vsyncpa %s344, 1

</llo_original>
